<compile_context>
chip_gen: v5e
topology: v5e:2x2
jax: 0.10.0
libtpu: 0.0.40
codegen_flags: <defaults>
</compile_context>

<pallas_src>
import functools

import jax
import jax.numpy as jnp
from jax.experimental import pallas as pl
from jax.experimental.pallas import tpu as pltpu


_CHUNK = 128                               # lane width of the partial-sum accumulator
_MAX_TL = 4096                             # cap on streamed lanes per grid step
_TARGET_X_BLOCK_BYTES = 8 * 1024 * 1024    # ~8 MiB streamed x slab per grid step


def _se_weight_kernel(x_ref, w1_ref, b1_ref, w2_ref, b2_ref, o_ref, acc_ref,
                      *, inv_l, tl, acc_w, last_li, rem):
    # x_ref : (TN, C, TL) input slab in native dtype
    # w1_ref: (C, C_r)   b1_ref: (1, C_r)
    # w2_ref: (C_r, C)   b2_ref: (1, C)
    # o_ref : (1, TN, C) output block, written once on the last L step
    # acc_ref: (TN, C, ACC_W) f32 lane-parallel partial sums (persistent scratch)
    li = pl.program_id(1)

    @pl.when(li == 0)
    def _init():
        acc_ref[...] = jnp.zeros(acc_ref.shape, jnp.float32)

    def _accumulate(valid):
        # `valid` is the *static* number of in-range lanes of this block.
        # Lane-parallel VPU adds only; the expensive cross-lane (XLU) reduce is
        # deferred to the epilogue so it runs once per N tile, not per step.
        full = valid // acc_w
        tail = valid % acc_w
        for k in range(full):
            off = k * acc_w
            acc_ref[...] += x_ref[:, :, off:off + acc_w].astype(jnp.float32)
        if tail:
            off = full * acc_w
            part = x_ref[:, :, off:off + acc_w].astype(jnp.float32)
            lane = jax.lax.broadcasted_iota(jnp.int32, part.shape, 2)
            acc_ref[...] += jnp.where(lane < tail, part, 0.0)

    if rem == tl:
        # L divides evenly into blocks: every block is fully valid.
        _accumulate(tl)
    else:
        # Ragged last L block: mask out-of-range lanes in-kernel instead of
        # padding x in HBM (padding would re-read + re-write the whole input).
        @pl.when(li != last_li)
        def _full_blocks():
            _accumulate(tl)

        @pl.when(li == last_li)
        def _ragged_block():
            _accumulate(rem)

    @pl.when(li == last_li)
    def _finalize():
        # Single cross-lane reduce, then mean over the true L.
        pooled = jnp.sum(acc_ref[...], axis=-1) * inv_l                 # (TN, C)
        # Tiny FC1 -> ReLU -> FC2 -> sigmoid chain, once per N tile.
        # (MXU default precision rounds f32 operands via bf16 passes; fine for a
        #  sigmoid gate. Raise matmul precision here if bit-closeness matters.)
        h = jnp.dot(pooled, w1_ref[...],
                    preferred_element_type=jnp.float32) + b1_ref[...]   # fc1
        h = jnp.maximum(h, 0.0)                                         # ReLU
        z = jnp.dot(h, w2_ref[...],
                    preferred_element_type=jnp.float32) + b2_ref[...]   # fc2
        sig = 1.0 / (1.0 + jnp.exp(-z))                                 # sigmoid
        o_ref[...] = sig[None].astype(o_ref.dtype)


def _pick_tiles(N, C, L, itemsize, block_n, block_l):
    # N tile: keep it small; ensure >= 2 tiles whenever N >= 2 so v7x's two
    # TensorCores both get work on the "parallel" grid axis.
    if block_n is None:
        tn = max(1, min(8, pl.cdiv(N, 2)))
    else:
        tn = max(1, min(block_n, N))
    # Guard: for very large C, shrink tn so even a 128-lane block stays sane.
    while tn > 1 and tn * C * _CHUNK * itemsize > 2 * _TARGET_X_BLOCK_BYTES:
        tn = (tn + 1) // 2

    # L tile: ~8 MiB streamed slab, multiple of 128 lanes, capped (bounds the
    # unrolled in-kernel chunk loop), never exceeding L.
    if L <= _CHUNK:
        tl = L                      # single block, full (small) last dim
    else:
        if block_l is None:
            tl = _TARGET_X_BLOCK_BYTES // max(1, tn * C * itemsize)
        else:
            tl = block_l
        tl = max(_CHUNK, min(tl, _MAX_TL))
        tl = (tl // _CHUNK) * _CHUNK
        tl = min(tl, (L // _CHUNK) * _CHUNK)
    return tn, tl


@functools.partial(jax.jit, static_argnames=("block_n", "block_l"))
def se_weight(x, w1, b1, w2, b2, *, block_n=None, block_l=None):
    """SEWeightModule forward.

    x:  (N, C, L) activations (streamed in native dtype, f32 accumulation)
    w1: (C_r, C, 1) fc1 1x1-Conv1d weight,  b1: (C_r,)
    w2: (C, C_r, 1) fc2 1x1-Conv1d weight,  b2: (C,)
    returns (N, C, 1) sigmoid attention weights (dtype of x).
    """
    N, C, L = x.shape
    C_r = w1.shape[0]
    assert w1.shape == (C_r, C, 1) and w2.shape == (C, C_r, 1)
    assert b1.shape == (C_r,) and b2.shape == (C,)

    itemsize = jnp.dtype(x.dtype).itemsize
    tn, tl = _pick_tiles(N, C, L, itemsize, block_n, block_l)
    grid_n = pl.cdiv(N, tn)
    grid_l = pl.cdiv(L, tl)
    rem = L - (grid_l - 1) * tl          # valid lanes of the last L block (static)
    acc_w = min(_CHUNK, tl)

    # Small FC params laid out for (rows, lanes) matmuls; fetched into VMEM once
    # (constant index maps), not per grid step.
    w1t = jnp.transpose(w1[:, :, 0]).astype(jnp.float32)   # (C, C_r)
    w2t = jnp.transpose(w2[:, :, 0]).astype(jnp.float32)   # (C_r, C)
    b1r = b1.reshape(1, C_r).astype(jnp.float32)
    b2r = b2.reshape(1, C).astype(jnp.float32)

    # VMEM budget: 2 double-buffered x slabs + accumulator + output + params.
    block_bytes = tn * C * tl * itemsize
    vmem_bytes = (2 * block_bytes + tn * C * acc_w * 4 + 2 * tn * C * itemsize
                  + 2 * (2 * C * C_r + C + C_r) * 4)
    # Raise the scoped-VMEM limit (v5e default is only 16 MiB) while staying far
    # under v7x's 64 MiB physical VMEM.
    vmem_limit = int(min(40 * 1024 * 1024, max(32 * 1024 * 1024, 2 * vmem_bytes)))

    cost = pl.CostEstimate(
        flops=int(N * C * L + 4 * N * C * C_r + 8 * N * C),
        transcendentals=int(N * C),
        bytes_accessed=int(N * C * L * itemsize + N * C * itemsize
                           + (2 * C * C_r + C + C_r) * 4),
    )

    kernel = functools.partial(
        _se_weight_kernel, inv_l=1.0 / L, tl=tl, acc_w=acc_w,
        last_li=grid_l - 1, rem=rem)

    out = pl.pallas_call(
        kernel,
        out_shape=jax.ShapeDtypeStruct((grid_n, tn, C), x.dtype),
        grid_spec=pltpu.PrefetchScalarGridSpec(
            num_scalar_prefetch=0,
            grid=(grid_n, grid_l),
            in_specs=[
                # streamed input slab: tiles over (N, L), full C
                pl.BlockSpec((tn, C, tl), lambda ni, li: (ni, 0, li)),
                # small params: full-array blocks, constant index -> fetched once
                pl.BlockSpec((C, C_r), lambda ni, li: (0, 0)),
                pl.BlockSpec((1, C_r), lambda ni, li: (0, 0)),
                pl.BlockSpec((C_r, C), lambda ni, li: (0, 0)),
                pl.BlockSpec((1, C), lambda ni, li: (0, 0)),
            ],
            out_specs=pl.BlockSpec((1, tn, C), lambda ni, li: (ni, 0, 0)),
            scratch_shapes=[pltpu.VMEM((tn, C, acc_w), jnp.float32)],
        ),
        compiler_params=pltpu.CompilerParams(
            dimension_semantics=("parallel", "arbitrary"),
            vmem_limit_bytes=vmem_limit),
        cost_estimate=cost,
    )(x, w1t, b1r, w2t, b2r)

    # (grid_n, tn, C) -> (N, C, 1); any ragged-N padding rows are dropped here.
    return out.reshape(grid_n * tn, C)[:N].reshape(N, C, 1)


def _reference(x, w1, b1, w2, b2):
    pooled = jnp.mean(x.astype(jnp.float32), axis=-1, keepdims=True)    # (N, C, 1)
    h = jnp.einsum("oc,ncl->nol", w1[:, :, 0], pooled) + b1[None, :, None]
    h = jnp.maximum(h, 0.0)
    z = jnp.einsum("oc,ncl->nol", w2[:, :, 0], h) + b2[None, :, None]
    return 1.0 / (1.0 + jnp.exp(-z))


if __name__ == "__main__":
    # Small shapes consistent with the module: batch=4, channels=64, reduction=2,
    # length=300.  L is deliberately NOT a multiple of 128 so the in-kernel
    # ragged-tail masking is exercised; block_l=128 also forces the multi-step
    # L accumulation path.
    N, C, L, reduction = 4, 64, 300, 2
    C_r = C // reduction

    key = jax.random.PRNGKey(0)
    kx, k1, kb1, k2, kb2 = jax.random.split(key, 5)
    x = jax.random.normal(kx, (N, C, L), dtype=jnp.float32)
    w1 = 0.2 * jax.random.normal(k1, (C_r, C, 1), dtype=jnp.float32)
    b1 = 0.1 * jax.random.normal(kb1, (C_r,), dtype=jnp.float32)
    w2 = 0.2 * jax.random.normal(k2, (C, C_r, 1), dtype=jnp.float32)
    b2 = 0.1 * jax.random.normal(kb2, (C,), dtype=jnp.float32)

    ref = _reference(x, w1, b1, w2, b2)

    # Forced small L tile: 3 L steps (2 full + 1 masked ragged tail).
    out_small = jax.block_until_ready(se_weight(x, w1, b1, w2, b2, block_l=128))
    # Auto tile sizing: 1 full 256-lane block + 1 masked ragged tail.
    out_auto = jax.block_until_ready(se_weight(x, w1, b1, w2, b2))

    for out in (out_small, out_auto):
        assert out.shape == (N, C, 1)
        # Tolerance covers the MXU default-precision (bf16-pass) FC matmuls.
        err = float(jnp.max(jnp.abs(out - ref)))
        assert jnp.allclose(out, ref, atol=2e-3, rtol=2e-3), err

    print("KERNEL_OK")
</pallas_src>

<mosaic_0001>
module attributes {stable_mosaic.version = 11 : i64} {
  func.func @_se_weight_kernel(%arg0: i32, %arg1: i32, %arg2: memref<2x64x128xf32, #tpu.memory_space<vmem>>, %arg3: memref<64x32xf32, #tpu.memory_space<vmem>>, %arg4: memref<1x32xf32, #tpu.memory_space<vmem>>, %arg5: memref<32x64xf32, #tpu.memory_space<vmem>>, %arg6: memref<1x64xf32, #tpu.memory_space<vmem>>, %arg7: memref<1x2x64xf32, #tpu.memory_space<vmem>>, %arg8: memref<2x64x128xf32, #tpu.memory_space<vmem>>) attributes {dimension_semantics = [#tpu.dimension_semantics<parallel>, #tpu.dimension_semantics<arbitrary>], iteration_bounds = array<i64: 2, 3>, scalar_prefetch = 0 : i64, scratch_operands = 1 : i64, tpu.core_type = #tpu.core_type<tc>, window_params = [{transform_indices = @transform_0, window_bounds = array<i64: 2, 64, 128>}, {pipeline_mode = #tpu.pipeline_mode<synchronous>, transform_indices = @transform_1, window_bounds = array<i64: 64, 32>}, {pipeline_mode = #tpu.pipeline_mode<synchronous>, transform_indices = @transform_2, window_bounds = array<i64: 1, 32>}, {pipeline_mode = #tpu.pipeline_mode<synchronous>, transform_indices = @transform_3, window_bounds = array<i64: 32, 64>}, {pipeline_mode = #tpu.pipeline_mode<synchronous>, transform_indices = @transform_4, window_bounds = array<i64: 1, 64>}, {transform_indices = @transform_5, window_bounds = array<i64: 1, 2, 64>}]} {
    %c0_i32 = arith.constant 0 : i32
    %0 = arith.cmpi eq, %arg1, %c0_i32 : i32
    %1 = arith.extui %0 : i1 to i32
    %c0_i32_0 = arith.constant 0 : i32
    %2 = arith.cmpi ne, %1, %c0_i32_0 : i32
    scf.if %2 {
      %cst = arith.constant 0.000000e+00 : f32
      %12 = vector.broadcast %cst : f32 to vector<2x64x128xf32>
      %c0 = arith.constant 0 : index
      %c0_6 = arith.constant 0 : index
      %c0_7 = arith.constant 0 : index
      %13 = vector.load %arg8[%c0, %c0_6, %c0_7] : memref<2x64x128xf32, #tpu.memory_space<vmem>>, vector<2x64x128xf32>
      tpu.vector_store %arg8[%c0, %c0_6, %c0_7], %12 {strides = array<i32>} : memref<2x64x128xf32, #tpu.memory_space<vmem>>, vector<2x64x128xf32>,
    } else {
    }
    %c2_i32 = arith.constant 2 : i32
    %3 = arith.cmpi ne, %arg1, %c2_i32 : i32
    %4 = arith.extui %3 : i1 to i32
    %c0_i32_1 = arith.constant 0 : i32
    %5 = arith.cmpi ne, %4, %c0_i32_1 : i32
    scf.if %5 {
      %c0 = arith.constant 0 : index
      %c0_6 = arith.constant 0 : index
      %c0_7 = arith.constant 0 : index
      %12 = vector.load %arg8[%c0, %c0_6, %c0_7] : memref<2x64x128xf32, #tpu.memory_space<vmem>>, vector<2x64x128xf32>
      %c0_8 = arith.constant 0 : index
      %c0_9 = arith.constant 0 : index
      %c0_10 = arith.constant 0 : index
      %13 = vector.load %arg2[%c0_8, %c0_9, %c0_10] : memref<2x64x128xf32, #tpu.memory_space<vmem>>, vector<2x64x128xf32>
      %14 = arith.addf %12, %13 : vector<2x64x128xf32>
      %c0_11 = arith.constant 0 : index
      %c0_12 = arith.constant 0 : index
      %c0_13 = arith.constant 0 : index
      %15 = vector.load %arg8[%c0_11, %c0_12, %c0_13] : memref<2x64x128xf32, #tpu.memory_space<vmem>>, vector<2x64x128xf32>
      tpu.vector_store %arg8[%c0_11, %c0_12, %c0_13], %14 {strides = array<i32>} : memref<2x64x128xf32, #tpu.memory_space<vmem>>, vector<2x64x128xf32>,
    } else {
    }
    %c2_i32_2 = arith.constant 2 : i32
    %6 = arith.cmpi eq, %arg1, %c2_i32_2 : i32
    %7 = arith.extui %6 : i1 to i32
    %c0_i32_3 = arith.constant 0 : i32
    %8 = arith.cmpi ne, %7, %c0_i32_3 : i32
    scf.if %8 {
      %c0 = arith.constant 0 : index
      %c0_6 = arith.constant 0 : index
      %c0_7 = arith.constant 0 : index
      %12 = vector.load %arg2[%c0, %c0_6, %c0_7] : memref<2x64x128xf32, #tpu.memory_space<vmem>>, vector<2x64x128xf32>
      %13 = tpu.iota {dimensions = array<i32: 2>} : vector<2x64x128xi32>
      %c0_8 = arith.constant 0 : index
      %c0_9 = arith.constant 0 : index
      %c0_10 = arith.constant 0 : index
      %14 = vector.load %arg8[%c0_8, %c0_9, %c0_10] : memref<2x64x128xf32, #tpu.memory_space<vmem>>, vector<2x64x128xf32>
      %c44_i32 = arith.constant 44 : i32
      %15 = vector.broadcast %c44_i32 : i32 to vector<2x64x128xi32>
      %16 = arith.cmpi slt, %13, %15 : vector<2x64x128xi32>
      %cst = arith.constant 0.000000e+00 : f32
      %17 = vector.broadcast %cst : f32 to vector<2x64x128xf32>
      %18 = arith.select %16, %12, %17 : vector<2x64x128xi1>, vector<2x64x128xf32>
      %19 = arith.addf %14, %18 : vector<2x64x128xf32>
      %c0_11 = arith.constant 0 : index
      %c0_12 = arith.constant 0 : index
      %c0_13 = arith.constant 0 : index
      %20 = vector.load %arg8[%c0_11, %c0_12, %c0_13] : memref<2x64x128xf32, #tpu.memory_space<vmem>>, vector<2x64x128xf32>
      tpu.vector_store %arg8[%c0_11, %c0_12, %c0_13], %19 {strides = array<i32>} : memref<2x64x128xf32, #tpu.memory_space<vmem>>, vector<2x64x128xf32>,
    } else {
    }
    %c2_i32_4 = arith.constant 2 : i32
    %9 = arith.cmpi eq, %arg1, %c2_i32_4 : i32
    %10 = arith.extui %9 : i1 to i32
    %c0_i32_5 = arith.constant 0 : i32
    %11 = arith.cmpi ne, %10, %c0_i32_5 : i32
    scf.if %11 {
      %c0 = arith.constant 0 : index
      %c0_6 = arith.constant 0 : index
      %c0_7 = arith.constant 0 : index
      %12 = vector.load %arg8[%c0, %c0_6, %c0_7] : memref<2x64x128xf32, #tpu.memory_space<vmem>>, vector<2x64x128xf32>
      %cst = arith.constant dense<0.000000e+00> : vector<2x64xf32>
      %13 = vector.multi_reduction <add>, %12, %cst [2] : vector<2x64x128xf32> to vector<2x64xf32>
      %cst_8 = arith.constant 0.00333333341 : f32
      %14 = vector.broadcast %cst_8 : f32 to vector<2x64xf32>
      %15 = arith.mulf %13, %14 : vector<2x64xf32>
      %c0_9 = arith.constant 0 : index
      %c0_10 = arith.constant 0 : index
      %16 = vector.load %arg3[%c0_9, %c0_10] : memref<64x32xf32, #tpu.memory_space<vmem>>, vector<64x32xf32>
      %cst_11 = arith.constant dense<0.000000e+00> : vector<2x32xf32>
      %17 = tpu.matmul %15, %16, %cst_11 {dimension_numbers = #tpu.dot_dimension_numbers<[1], [0], [0], [1], [0, 0, 1, 1], [], []>} : vector<2x64xf32>, vector<64x32xf32>, vector<2x32xf32> -> vector<2x32xf32>
      %c0_12 = arith.constant 0 : index
      %c0_13 = arith.constant 0 : index
      %18 = vector.load %arg4[%c0_12, %c0_13] : memref<1x32xf32, #tpu.memory_space<vmem>>, vector<1x32xf32>
      %19 = vector.broadcast %18 : vector<1x32xf32> to vector<2x32xf32>
      %20 = arith.addf %17, %19 : vector<2x32xf32>
      %cst_14 = arith.constant 0.000000e+00 : f32
      %21 = vector.broadcast %cst_14 : f32 to vector<2x32xf32>
      %22 = arith.maximumf %20, %21 : vector<2x32xf32>
      %c0_15 = arith.constant 0 : index
      %c0_16 = arith.constant 0 : index
      %23 = vector.load %arg5[%c0_15, %c0_16] : memref<32x64xf32, #tpu.memory_space<vmem>>, vector<32x64xf32>
      %cst_17 = arith.constant dense<0.000000e+00> : vector<2x64xf32>
      %24 = tpu.matmul %22, %23, %cst_17 {dimension_numbers = #tpu.dot_dimension_numbers<[1], [0], [0], [1], [0, 0, 1, 1], [], []>} : vector<2x32xf32>, vector<32x64xf32>, vector<2x64xf32> -> vector<2x64xf32>
      %c0_18 = arith.constant 0 : index
      %c0_19 = arith.constant 0 : index
      %25 = vector.load %arg6[%c0_18, %c0_19] : memref<1x64xf32, #tpu.memory_space<vmem>>, vector<1x64xf32>
      %26 = vector.broadcast %25 : vector<1x64xf32> to vector<2x64xf32>
      %27 = arith.addf %24, %26 : vector<2x64xf32>
      %cst_20 = arith.constant 0.000000e+00 : f32
      %28 = vector.broadcast %cst_20 : f32 to vector<2x64xf32>
      %29 = arith.subf %28, %27 : vector<2x64xf32>
      %30 = math.exp %29 : vector<2x64xf32>
      %cst_21 = arith.constant 1.000000e+00 : f32
      %31 = vector.broadcast %cst_21 : f32 to vector<2x64xf32>
      %32 = arith.addf %31, %30 : vector<2x64xf32>
      %cst_22 = arith.constant 1.000000e+00 : f32
      %33 = vector.broadcast %cst_22 : f32 to vector<2x64xf32>
      %34 = arith.divf %33, %32 : vector<2x64xf32>
      %35 = vector.shape_cast %34 : vector<2x64xf32> to vector<1x2x64xf32>
      %c0_23 = arith.constant 0 : index
      %c0_24 = arith.constant 0 : index
      %c0_25 = arith.constant 0 : index
      %36 = vector.load %arg7[%c0_23, %c0_24, %c0_25] : memref<1x2x64xf32, #tpu.memory_space<vmem>>, vector<1x2x64xf32>
      tpu.vector_store %arg7[%c0_23, %c0_24, %c0_25], %35 {strides = array<i32>} : memref<1x2x64xf32, #tpu.memory_space<vmem>>, vector<1x2x64xf32>,
    } else {
    }
    return
  }
  func.func @transform_0(%arg0: i32, %arg1: i32) -> (i32, i32, i32) {
    %c0_i32 = arith.constant 0 : i32
    %c0_i32_0 = arith.constant 0 : i32
    return %arg0, %c0_i32, %arg1 : i32, i32, i32
  }
  func.func @transform_1(%arg0: i32, %arg1: i32) -> (i32, i32) {
    %c0_i32 = arith.constant 0 : i32
    %c0_i32_0 = arith.constant 0 : i32
    %c0_i32_1 = arith.constant 0 : i32
    return %c0_i32, %c0_i32_0 : i32, i32
  }
  func.func @transform_2(%arg0: i32, %arg1: i32) -> (i32, i32) {
    %c0_i32 = arith.constant 0 : i32
    %c0_i32_0 = arith.constant 0 : i32
    %c0_i32_1 = arith.constant 0 : i32
    return %c0_i32, %c0_i32_0 : i32, i32
  }
  func.func @transform_3(%arg0: i32, %arg1: i32) -> (i32, i32) {
    %c0_i32 = arith.constant 0 : i32
    %c0_i32_0 = arith.constant 0 : i32
    %c0_i32_1 = arith.constant 0 : i32
    return %c0_i32, %c0_i32_0 : i32, i32
  }
  func.func @transform_4(%arg0: i32, %arg1: i32) -> (i32, i32) {
    %c0_i32 = arith.constant 0 : i32
    %c0_i32_0 = arith.constant 0 : i32
    %c0_i32_1 = arith.constant 0 : i32
    return %c0_i32, %c0_i32_0 : i32, i32
  }
  func.func @transform_5(%arg0: i32, %arg1: i32) -> (i32, i32, i32) {
    %c0_i32 = arith.constant 0 : i32
    %c0_i32_0 = arith.constant 0 : i32
    %c0_i32_1 = arith.constant 0 : i32
    return %arg0, %c0_i32, %c0_i32_0 : i32, i32, i32
  }
}

</mosaic_0001>

<llo_original>
// kernel: se_weight.1
$region0: #{se_weight.1}
  #allocation0 [shape = 'u32[]', space=smem, size = 0x4, offset = 0x4, fixed_abs, tag = 'smem constant byte address 0x4 - core index']
  #allocation1 [shape = 'u32[72,128]{1,0:T(1,128)}', space=vmem, size = 0x9000, scoped, tag = 'internal scratch']
  #allocation2 [shape = 'f32[2,64,128]{2,1,0:T(8,128)}', space=vmem, size = 0x10000, scoped, tag = 'scratch operand']
  %s0 = inlined_call_operand.hbm [shape: f32[4,64,300], index: 0, kind: input, shape index: {}]
  %s1 = inlined_call_operand.vmem [shape: f32[64,32], index: 1, kind: input, shape index: {}]
  %s2 = inlined_call_operand.vmem [shape: f32[1,32], index: 2, kind: input, shape index: {}]
  %s3 = inlined_call_operand.vmem [shape: f32[32,64], index: 3, kind: input, shape index: {}]
  %s4 = inlined_call_operand.vmem [shape: f32[1,64], index: 4, kind: input, shape index: {}]
  %s5 = inlined_call_operand.hbm [shape: f32[2,2,64], index: 5, kind: output, shape index: {}]
  %s6 = sld [smem:[#allocation0]]
  $region69: #{se_weight.1} parent=0
    _
  %s8 = ssub.s32 1, %s6
  %s9 = scalar_select 0, %s8, %s6
  $region1: #{se_weight.1} parent=0
    #allocation3 [shape = 'u8[131072]{0}', space=vmem, size = 0x20000, scoped, tag = 'input window, operand 0']
    #allocation4 [shape = 's32[2]{0}', space=sflag, size = 0x8, scoped, tag = 'scoped memory for se_weight.1']
    #allocation5 [shape = 's32[2]{0}', space=sflag, size = 0x8, scoped, tag = 'scoped memory for se_weight.1']
    #allocation6 [shape = 'u8[2048]{0}', space=vmem, size = 0x800, scoped, tag = 'output window, operand 0']
    %10 = vsyncpa [#allocation4], 0
    %s11 = scalar_lea.sflag [#allocation4], 1
    %12 = vsyncpa %s11, 0
    %13 = vsyncpa [#allocation5], 0
    %s14 = scalar_lea.sflag [#allocation5], 1
    %15 = vsyncpa %s14, 0
    loop: start=0, step=1, limit=8
    $region2: #{se_weight.1} parent=1 // loop_pre_header
      _
    $region3: #{se_weight.1} parent=1 // loop_header
      %s17 = sphi 0, %s21
      %p18 = scmp.ge.s32.totalorder %s17, 8
      %s24 = sphi 0, %s36
      %s25 = sphi 0, %s32
      %s26 = sphi 0, %s24
      %s27 = sphi 0, %s25
      %s28 = sphi 0, %s26
      %s29 = sphi 0, %s27
      %s41 = sphi 0, %s43
      %s44 = sphi 0, %s41
      %s45 = sphi 0, %s44
      %s61 = sphi 0, %s45
      %s65 = sphi 0, %s65
      %s67 = sphi 0, %s65
      %s68 = sphi 0, %s67
      %s82 = sphi 0, %s68
      %s86 = sphi 0, %s86
      %s88 = sphi 0, %s86
      %s89 = sphi 0, %s88
      %s103 = sphi 0, %s89
      %s107 = sphi 0, %s107
      %s109 = sphi 0, %s107
      %s110 = sphi 0, %s109
      %s124 = sphi 0, %s110
      %s128 = sphi 0, %s128
      %s130 = sphi 0, %s128
      %s131 = sphi 0, %s130
      %s145 = sphi 0, %s131
      %s151 = sphi 0, %s153
      %s154 = sphi 0, %s151
      %s155 = sphi 0, %s154
      %s171 = sphi 0, %s155
    $region4: #{se_weight.1} parent=1 // loop_header_branch
      %20 = sbr.rel (%p18) target = $region8
    $region5: #{se_weight.1} parent=1 // loop_body
      %s22 = ssub.s32 %s17, 1
      %s23 = ssub.s32 %s17, 2
      %s30 = sadd.s32 1, %s25
      %p31 = scmp.ge.s32.totalorder %s30, 3
      %s32 = scalar_select %p31, 0, %s30
      %s33 = sadd.s32 1, %s24
      %s34 = scalar_select %p31, %s33, %s24
      %p35 = scmp.ge.s32.totalorder %s34, 2
      %s36 = scalar_select %p35, 0, %s34
      %s37 = ssub.s32 %s24, %s36
      %s38 = ssub.s32 %s25, %s32
      %s39 = sor.u32 %s37, %s38
      %p40 = scmp.eq.s32.totalorder %s39, 0
      %s42 = sadd.s32 %s41, 1
      %s43 = scalar_select %p40, %s41, %s42
      %p46 = pneg %p40
      %p47 = scmp.eq.s32.totalorder %s17, 5
      %p48 = por %p46, %p47
      %p49 = scmp.ne.s32.totalorder %s41, %s44
      %p50 = scmp.eq.s32.totalorder %s17, 0
      %p51 = por %p49, %p50
      %p52 = scmp.ne.s32.totalorder %s41, %s44
      %p53 = scmp.eq.s32.totalorder %s22, 5
      %p54 = por %p52, %p53
      %p55 = scmp.ne.s32.totalorder %s44, %s45
      %p56 = scmp.eq.s32.totalorder %s22, 0
      %p57 = por %p55, %p56
      %p58 = scmp.ne.s32.totalorder %s44, %s45
      %p59 = scmp.eq.s32.totalorder %s23, 5
      %p60 = por %p58, %p59
      %p62 = scmp.ne.s32.totalorder %s45, %s61
      %p63 = scmp.eq.s32.totalorder %s23, 0
      %p64 = por %p62, %p63
      %s66 = sadd.s32 %s65, 1
      %p69 = scmp.eq.s32.totalorder %s17, 5
      %p70 = scmp.ne.s32.totalorder %s65, %s67
      %p71 = scmp.eq.s32.totalorder %s17, 0
      %p72 = por %p70, %p71
      %p73 = scmp.ne.s32.totalorder %s65, %s67
      %p74 = scmp.eq.s32.totalorder %s22, 5
      %p75 = por %p73, %p74
      %p76 = scmp.ne.s32.totalorder %s67, %s68
      %p77 = scmp.eq.s32.totalorder %s22, 0
      %p78 = por %p76, %p77
      %p79 = scmp.ne.s32.totalorder %s67, %s68
      %p80 = scmp.eq.s32.totalorder %s23, 5
      %p81 = por %p79, %p80
      %p83 = scmp.ne.s32.totalorder %s68, %s82
      %p84 = scmp.eq.s32.totalorder %s23, 0
      %p85 = por %p83, %p84
      %s87 = sadd.s32 %s86, 1
      %p90 = scmp.eq.s32.totalorder %s17, 5
      %p91 = scmp.ne.s32.totalorder %s86, %s88
      %p92 = scmp.eq.s32.totalorder %s17, 0
      %p93 = por %p91, %p92
      %p94 = scmp.ne.s32.totalorder %s86, %s88
      %p95 = scmp.eq.s32.totalorder %s22, 5
      %p96 = por %p94, %p95
      %p97 = scmp.ne.s32.totalorder %s88, %s89
      %p98 = scmp.eq.s32.totalorder %s22, 0
      %p99 = por %p97, %p98
      %p100 = scmp.ne.s32.totalorder %s88, %s89
      %p101 = scmp.eq.s32.totalorder %s23, 5
      %p102 = por %p100, %p101
      %p104 = scmp.ne.s32.totalorder %s89, %s103
      %p105 = scmp.eq.s32.totalorder %s23, 0
      %p106 = por %p104, %p105
      %s108 = sadd.s32 %s107, 1
      %p111 = scmp.eq.s32.totalorder %s17, 5
      %p112 = scmp.ne.s32.totalorder %s107, %s109
      %p113 = scmp.eq.s32.totalorder %s17, 0
      %p114 = por %p112, %p113
      %p115 = scmp.ne.s32.totalorder %s107, %s109
      %p116 = scmp.eq.s32.totalorder %s22, 5
      %p117 = por %p115, %p116
      %p118 = scmp.ne.s32.totalorder %s109, %s110
      %p119 = scmp.eq.s32.totalorder %s22, 0
      %p120 = por %p118, %p119
      %p121 = scmp.ne.s32.totalorder %s109, %s110
      %p122 = scmp.eq.s32.totalorder %s23, 5
      %p123 = por %p121, %p122
      %p125 = scmp.ne.s32.totalorder %s110, %s124
      %p126 = scmp.eq.s32.totalorder %s23, 0
      %p127 = por %p125, %p126
      %s129 = sadd.s32 %s128, 1
      %p132 = scmp.eq.s32.totalorder %s17, 5
      %p133 = scmp.ne.s32.totalorder %s128, %s130
      %p134 = scmp.eq.s32.totalorder %s17, 0
      %p135 = por %p133, %p134
      %p136 = scmp.ne.s32.totalorder %s128, %s130
      %p137 = scmp.eq.s32.totalorder %s22, 5
      %p138 = por %p136, %p137
      %p139 = scmp.ne.s32.totalorder %s130, %s131
      %p140 = scmp.eq.s32.totalorder %s22, 0
      %p141 = por %p139, %p140
      %p142 = scmp.ne.s32.totalorder %s130, %s131
      %p143 = scmp.eq.s32.totalorder %s23, 5
      %p144 = por %p142, %p143
      %p146 = scmp.ne.s32.totalorder %s131, %s145
      %p147 = scmp.eq.s32.totalorder %s23, 0
      %p148 = por %p146, %p147
      %s149 = ssub.s32 %s24, %s36
      %p150 = scmp.eq.s32.totalorder %s149, 0
      %s152 = sadd.s32 %s151, 1
      %s153 = scalar_select %p150, %s151, %s152
      %p156 = pneg %p150
      %p157 = scmp.eq.s32.totalorder %s17, 5
      %p158 = por %p156, %p157
      %p159 = scmp.ne.s32.totalorder %s151, %s154
      %p160 = scmp.eq.s32.totalorder %s17, 0
      %p161 = por %p159, %p160
      %p162 = scmp.ne.s32.totalorder %s151, %s154
      %p163 = scmp.eq.s32.totalorder %s22, 5
      %p164 = por %p162, %p163
      %p165 = scmp.ne.s32.totalorder %s154, %s155
      %p166 = scmp.eq.s32.totalorder %s22, 0
      %p167 = por %p165, %p166
      %p168 = scmp.ne.s32.totalorder %s154, %s155
      %p169 = scmp.eq.s32.totalorder %s23, 5
      %p170 = por %p168, %p169
      %p172 = scmp.ne.s32.totalorder %s155, %s171
      %p173 = scmp.eq.s32.totalorder %s23, 0
      %p174 = por %p172, %p173
      %p175 = scmp.le.s32.totalorder 1, %s17
      %p176 = scmp.lt.s32.totalorder %s17, 7
      %p177 = pnand %p175, %p176
      %p178 = pneg %p177
      // Predicated region
      $region9: #{se_weight.1} parent=5 // pred_check
        _
      $region10: #{se_weight.1} parent=5 // pred_check_branch
        %180 = sbr.rel (%p177) target = $region12
      $region11: #{se_weight.1} parent=5 // pred_region
        %s181 = ssub.s32 %s17, 1
        // Predicated region
        $region13: #{se_weight.1} parent=11 // pred_check
          %p182 = pneg %p78
        $region14: #{se_weight.1} parent=11 // pred_check_branch
          %184 = sbr.rel (%p182) target = $region16
        $region15: #{se_weight.1} parent=11 // pred_region
          _
        $region16: #{se_weight.1} parent=11 // pred_fallthru
          _
        // Predicated region
        $region17: #{se_weight.1} parent=11 // pred_check
          %p185 = pneg %p99
        $region18: #{se_weight.1} parent=11 // pred_check_branch
          %187 = sbr.rel (%p185) target = $region20
        $region19: #{se_weight.1} parent=11 // pred_region
          _
        $region20: #{se_weight.1} parent=11 // pred_fallthru
          _
        // Predicated region
        $region21: #{se_weight.1} parent=11 // pred_check
          %p188 = pneg %p120
        $region22: #{se_weight.1} parent=11 // pred_check_branch
          %190 = sbr.rel (%p188) target = $region24
        $region23: #{se_weight.1} parent=11 // pred_region
          _
        $region24: #{se_weight.1} parent=11 // pred_fallthru
          _
        // Predicated region
        $region25: #{se_weight.1} parent=11 // pred_check
          %p191 = pneg %p141
        $region26: #{se_weight.1} parent=11 // pred_check_branch
          %193 = sbr.rel (%p191) target = $region28
        $region27: #{se_weight.1} parent=11 // pred_region
          _
        $region28: #{se_weight.1} parent=11 // pred_fallthru
          _
      $region12: #{se_weight.1} parent=5 // pred_fallthru
        _
      %p194 = scmp.lt.s32.totalorder %s17, 6
      // Predicated region
      $region29: #{se_weight.1} parent=5 // pred_check
        %p195 = pneg %p194
      $region30: #{se_weight.1} parent=5 // pred_check_branch
        %197 = sbr.rel (%p195) target = $region32
      $region31: #{se_weight.1} parent=5 // pred_region
        // Predicated region
        $region33: #{se_weight.1} parent=31 // pred_check
          %p198 = pneg %p51
        $region34: #{se_weight.1} parent=31 // pred_check_branch
          %200 = sbr.rel (%p198) target = $region36
        $region35: #{se_weight.1} parent=31 // pred_region
          %s201 = sand.u32 %s41, 1
          %s202 = scalar_lea.sflag [#allocation4], %s201
          %s203 = sand.u32 %s41, 1
          %s204 = smul.addr %s203, 128
          %s205 = scalar_lea.vmem [#allocation3], %s204
          %s206 = smul.u32 2, %s24
          %208 = vsyncadd %s202, 0
          %s209 = smul.addr %s206, 24
          %s210 = sadd.s32 %s25, %s209
          %s211 = smul.addr %s210, 8
          %s212 = scalar_lea.hbm %s0, %s211
          %s213 = sshll.u32 %s212, 4
          %s214 = int_to_ptr.hbm [resolvable:$true] %s213
          %s215 = sshll.u32 %s205, 4
          %s216 = int_to_ptr.vmem [resolvable:$true] %s215
          %221 = dma.hbm_to_vmem [thread:$0]  %s214, 2048, %s216, %s202, 384, 128, 8
        $region36: #{se_weight.1} parent=31 // pred_fallthru
          _
      $region32: #{se_weight.1} parent=5 // pred_fallthru
        _
      %p222 = scmp.le.s32.totalorder 1, %s17
      %p223 = scmp.lt.s32.totalorder %s17, 7
      %p224 = pnand %p222, %p223
      %p225 = pneg %p224
      // Predicated region
      $region37: #{se_weight.1} parent=5 // pred_check
        _
      $region38: #{se_weight.1} parent=5 // pred_check_branch
        %227 = sbr.rel (%p224) target = $region40
      $region39: #{se_weight.1} parent=5 // pred_region
        %s228 = ssub.s32 %s17, 1
        %s229 = sand.u32 %s44, 1
        %s230 = scalar_lea.sflag [#allocation4], %s229
        %s231 = sand.u32 %s44, 1
        %s232 = smul.addr %s231, 128
        %s233 = scalar_lea.vmem [#allocation3], %s232
        // Predicated region
        $region41: #{se_weight.1} parent=39 // pred_check
          %p234 = pneg %p57
        $region42: #{se_weight.1} parent=39 // pred_check_branch
          %236 = sbr.rel (%p234) target = $region44
        $region43: #{se_weight.1} parent=39 // pred_region
          %238 = dma.done %s230, 2048
        $region44: #{se_weight.1} parent=39 // pred_fallthru
          _
        %s239 = sand.u32 %s44, 1
        %s240 = scalar_lea.sflag [#allocation4], %s239
        %s241 = sand.u32 %s44, 1
        %s242 = smul.addr %s241, 128
        %s243 = scalar_lea.vmem [#allocation3], %s242
        %p244 = pneg %p57
        %p245 = pneg %p54
        %p246 = pneg %p78
        %p247 = pneg %p75
        %p248 = pneg %p99
        %p249 = pneg %p96
        %p250 = pneg %p120
        %p251 = pneg %p117
        %p252 = pneg %p141
        %p253 = pneg %p138
        %p254 = pneg %p167
        %p255 = pneg %p164
        %s256 = sand.u32 %s154, 1
        %s257 = scalar_lea.sflag [#allocation5], %s256
        %s258 = sand.u32 %s154, 1
        %s259 = smul.addr %s258, 2
        %s260 = scalar_lea.vmem [#allocation6], %s259
        %s261 = smul.u32 2, %s26
        %p262 = scmp.eq.s32.totalorder %s27, 0
        // Predicated region
        $region45: #{se_weight.1} parent=39 // pred_check
          %p263 = pneg %p262
        $region46: #{se_weight.1} parent=39 // pred_check_branch
          %265 = sbr.rel (%p263) target = $region48
        $region47: #{se_weight.1} parent=39 // pred_region
          %266 = vst [vmem:[#allocation2] sm:$0xff] 0.0
          %267 = vst [vmem:[#allocation2 + $0x8] sm:$0xff] 0.0
          %268 = vst [vmem:[#allocation2 + $0x10] sm:$0xff] 0.0
          %269 = vst [vmem:[#allocation2 + $0x18] sm:$0xff] 0.0
          %270 = vst [vmem:[#allocation2 + $0x20] sm:$0xff] 0.0
          %271 = vst [vmem:[#allocation2 + $0x28] sm:$0xff] 0.0
          %272 = vst [vmem:[#allocation2 + $0x30] sm:$0xff] 0.0
          %273 = vst [vmem:[#allocation2 + $0x38] sm:$0xff] 0.0
          %274 = vst [vmem:[#allocation2 + $0x40] sm:$0xff] 0.0
          %275 = vst [vmem:[#allocation2 + $0x48] sm:$0xff] 0.0
          %276 = vst [vmem:[#allocation2 + $0x50] sm:$0xff] 0.0
          %277 = vst [vmem:[#allocation2 + $0x58] sm:$0xff] 0.0
          %278 = vst [vmem:[#allocation2 + $0x60] sm:$0xff] 0.0
          %279 = vst [vmem:[#allocation2 + $0x68] sm:$0xff] 0.0
          %280 = vst [vmem:[#allocation2 + $0x70] sm:$0xff] 0.0
          %281 = vst [vmem:[#allocation2 + $0x78] sm:$0xff] 0.0
        $region48: #{se_weight.1} parent=39 // pred_fallthru
          _
        %p282 = scmp.ne.s32.totalorder %s27, 2
        // Predicated region
        $region49: #{se_weight.1} parent=39 // pred_check
          %p283 = pneg %p282
        $region50: #{se_weight.1} parent=39 // pred_check_branch
          %285 = sbr.rel (%p283) target = $region52
        $region51: #{se_weight.1} parent=39 // pred_region
          %v286 = vld [vmem:[#allocation2] sm:$0xff]
          %v287 = vld [vmem:[#allocation2 + $0x8] sm:$0xff]
          %v288 = vld [vmem:[#allocation2 + $0x10] sm:$0xff]
          %v289 = vld [vmem:[#allocation2 + $0x18] sm:$0xff]
          %v290 = vld [vmem:[#allocation2 + $0x20] sm:$0xff]
          %v291 = vld [vmem:[#allocation2 + $0x28] sm:$0xff]
          %v292 = vld [vmem:[#allocation2 + $0x30] sm:$0xff]
          %v293 = vld [vmem:[#allocation2 + $0x38] sm:$0xff]
          %v294 = vld [vmem:[#allocation2 + $0x40] sm:$0xff]
          %v295 = vld [vmem:[#allocation2 + $0x48] sm:$0xff]
          %v296 = vld [vmem:[#allocation2 + $0x50] sm:$0xff]
          %v297 = vld [vmem:[#allocation2 + $0x58] sm:$0xff]
          %v298 = vld [vmem:[#allocation2 + $0x60] sm:$0xff]
          %v299 = vld [vmem:[#allocation2 + $0x68] sm:$0xff]
          %v300 = vld [vmem:[#allocation2 + $0x70] sm:$0xff]
          %v301 = vld [vmem:[#allocation2 + $0x78] sm:$0xff]
          %v302 = vld [vmem:[%s233] sm:$0xff]
          %v303 = vld [vmem:[%s233 + $0x8] sm:$0xff]
          %v304 = vld [vmem:[%s233 + $0x10] sm:$0xff]
          %v305 = vld [vmem:[%s233 + $0x18] sm:$0xff]
          %v306 = vld [vmem:[%s233 + $0x20] sm:$0xff]
          %v307 = vld [vmem:[%s233 + $0x28] sm:$0xff]
          %v308 = vld [vmem:[%s233 + $0x30] sm:$0xff]
          %v309 = vld [vmem:[%s233 + $0x38] sm:$0xff]
          %v310 = vld [vmem:[%s233 + $0x40] sm:$0xff]
          %v311 = vld [vmem:[%s233 + $0x48] sm:$0xff]
          %v312 = vld [vmem:[%s233 + $0x50] sm:$0xff]
          %v313 = vld [vmem:[%s233 + $0x58] sm:$0xff]
          %v314 = vld [vmem:[%s233 + $0x60] sm:$0xff]
          %v315 = vld [vmem:[%s233 + $0x68] sm:$0xff]
          %v316 = vld [vmem:[%s233 + $0x70] sm:$0xff]
          %v317 = vld [vmem:[%s233 + $0x78] sm:$0xff]
          %v318 = vadd.f32 %v286, %v302
          %v319 = vadd.f32 %v287, %v303
          %v320 = vadd.f32 %v288, %v304
          %v321 = vadd.f32 %v289, %v305
          %v322 = vadd.f32 %v290, %v306
          %v323 = vadd.f32 %v291, %v307
          %v324 = vadd.f32 %v292, %v308
          %v325 = vadd.f32 %v293, %v309
          %v326 = vadd.f32 %v294, %v310
          %v327 = vadd.f32 %v295, %v311
          %v328 = vadd.f32 %v296, %v312
          %v329 = vadd.f32 %v297, %v313
          %v330 = vadd.f32 %v298, %v314
          %v331 = vadd.f32 %v299, %v315
          %v332 = vadd.f32 %v300, %v316
          %v333 = vadd.f32 %v301, %v317
          %334 = vst [vmem:[#allocation2] sm:$0xff] %v318
          %335 = vst [vmem:[#allocation2 + $0x8] sm:$0xff] %v319
          %336 = vst [vmem:[#allocation2 + $0x10] sm:$0xff] %v320
          %337 = vst [vmem:[#allocation2 + $0x18] sm:$0xff] %v321
          %338 = vst [vmem:[#allocation2 + $0x20] sm:$0xff] %v322
          %339 = vst [vmem:[#allocation2 + $0x28] sm:$0xff] %v323
          %340 = vst [vmem:[#allocation2 + $0x30] sm:$0xff] %v324
          %341 = vst [vmem:[#allocation2 + $0x38] sm:$0xff] %v325
          %342 = vst [vmem:[#allocation2 + $0x40] sm:$0xff] %v326
          %343 = vst [vmem:[#allocation2 + $0x48] sm:$0xff] %v327
          %344 = vst [vmem:[#allocation2 + $0x50] sm:$0xff] %v328
          %345 = vst [vmem:[#allocation2 + $0x58] sm:$0xff] %v329
          %346 = vst [vmem:[#allocation2 + $0x60] sm:$0xff] %v330
          %347 = vst [vmem:[#allocation2 + $0x68] sm:$0xff] %v331
          %348 = vst [vmem:[#allocation2 + $0x70] sm:$0xff] %v332
          %349 = vst [vmem:[#allocation2 + $0x78] sm:$0xff] %v333
        $region52: #{se_weight.1} parent=39 // pred_fallthru
          _
        %p350 = scmp.eq.s32.totalorder %s27, 2
        // Predicated region
        $region53: #{se_weight.1} parent=39 // pred_check
          %p351 = pneg %p350
        $region54: #{se_weight.1} parent=39 // pred_check_branch
          %353 = sbr.rel (%p351) target = $region56
        $region55: #{se_weight.1} parent=39 // pred_region
          %v354 = vld [vmem:[%s233] sm:$0xff]
          %v355 = vld [vmem:[%s233 + $0x8] sm:$0xff]
          %v356 = vld [vmem:[%s233 + $0x10] sm:$0xff]
          %v357 = vld [vmem:[%s233 + $0x18] sm:$0xff]
          %v358 = vld [vmem:[%s233 + $0x20] sm:$0xff]
          %v359 = vld [vmem:[%s233 + $0x28] sm:$0xff]
          %v360 = vld [vmem:[%s233 + $0x30] sm:$0xff]
          %v361 = vld [vmem:[%s233 + $0x38] sm:$0xff]
          %v362 = vld [vmem:[%s233 + $0x40] sm:$0xff]
          %v363 = vld [vmem:[%s233 + $0x48] sm:$0xff]
          %v364 = vld [vmem:[%s233 + $0x50] sm:$0xff]
          %v365 = vld [vmem:[%s233 + $0x58] sm:$0xff]
          %v366 = vld [vmem:[%s233 + $0x60] sm:$0xff]
          %v367 = vld [vmem:[%s233 + $0x68] sm:$0xff]
          %v368 = vld [vmem:[%s233 + $0x70] sm:$0xff]
          %v369 = vld [vmem:[%s233 + $0x78] sm:$0xff]
          %v370 = vlaneseq
          %v371 = vand.u32 %v370, 127
          %v372 = vld [vmem:[#allocation2] sm:$0xff]
          %v373 = vld [vmem:[#allocation2 + $0x8] sm:$0xff]
          %v374 = vld [vmem:[#allocation2 + $0x10] sm:$0xff]
          %v375 = vld [vmem:[#allocation2 + $0x18] sm:$0xff]
          %v376 = vld [vmem:[#allocation2 + $0x20] sm:$0xff]
          %v377 = vld [vmem:[#allocation2 + $0x28] sm:$0xff]
          %v378 = vld [vmem:[#allocation2 + $0x30] sm:$0xff]
          %v379 = vld [vmem:[#allocation2 + $0x38] sm:$0xff]
          %v380 = vld [vmem:[#allocation2 + $0x40] sm:$0xff]
          %v381 = vld [vmem:[#allocation2 + $0x48] sm:$0xff]
          %v382 = vld [vmem:[#allocation2 + $0x50] sm:$0xff]
          %v383 = vld [vmem:[#allocation2 + $0x58] sm:$0xff]
          %v384 = vld [vmem:[#allocation2 + $0x60] sm:$0xff]
          %v385 = vld [vmem:[#allocation2 + $0x68] sm:$0xff]
          %v386 = vld [vmem:[#allocation2 + $0x70] sm:$0xff]
          %v387 = vld [vmem:[#allocation2 + $0x78] sm:$0xff]
          %vm388 = vcmp.lt.s32.totalorder %v371, 44
          %v389 = vsel %vm388, %v354, 0.0
          %v390 = vsel %vm388, %v355, 0.0
          %v391 = vsel %vm388, %v356, 0.0
          %v392 = vsel %vm388, %v357, 0.0
          %v393 = vsel %vm388, %v358, 0.0
          %v394 = vsel %vm388, %v359, 0.0
          %v395 = vsel %vm388, %v360, 0.0
          %v396 = vsel %vm388, %v361, 0.0
          %v397 = vsel %vm388, %v362, 0.0
          %v398 = vsel %vm388, %v363, 0.0
          %v399 = vsel %vm388, %v364, 0.0
          %v400 = vsel %vm388, %v365, 0.0
          %v401 = vsel %vm388, %v366, 0.0
          %v402 = vsel %vm388, %v367, 0.0
          %v403 = vsel %vm388, %v368, 0.0
          %v404 = vsel %vm388, %v369, 0.0
          %v405 = vadd.f32 %v372, %v389
          %v406 = vadd.f32 %v373, %v390
          %v407 = vadd.f32 %v374, %v391
          %v408 = vadd.f32 %v375, %v392
          %v409 = vadd.f32 %v376, %v393
          %v410 = vadd.f32 %v377, %v394
          %v411 = vadd.f32 %v378, %v395
          %v412 = vadd.f32 %v379, %v396
          %v413 = vadd.f32 %v380, %v397
          %v414 = vadd.f32 %v381, %v398
          %v415 = vadd.f32 %v382, %v399
          %v416 = vadd.f32 %v383, %v400
          %v417 = vadd.f32 %v384, %v401
          %v418 = vadd.f32 %v385, %v402
          %v419 = vadd.f32 %v386, %v403
          %v420 = vadd.f32 %v387, %v404
          %421 = vst [vmem:[#allocation2] sm:$0xff] %v405
          %422 = vst [vmem:[#allocation2 + $0x8] sm:$0xff] %v406
          %423 = vst [vmem:[#allocation2 + $0x10] sm:$0xff] %v407
          %424 = vst [vmem:[#allocation2 + $0x18] sm:$0xff] %v408
          %425 = vst [vmem:[#allocation2 + $0x20] sm:$0xff] %v409
          %426 = vst [vmem:[#allocation2 + $0x28] sm:$0xff] %v410
          %427 = vst [vmem:[#allocation2 + $0x30] sm:$0xff] %v411
          %428 = vst [vmem:[#allocation2 + $0x38] sm:$0xff] %v412
          %429 = vst [vmem:[#allocation2 + $0x40] sm:$0xff] %v413
          %430 = vst [vmem:[#allocation2 + $0x48] sm:$0xff] %v414
          %431 = vst [vmem:[#allocation2 + $0x50] sm:$0xff] %v415
          %432 = vst [vmem:[#allocation2 + $0x58] sm:$0xff] %v416
          %433 = vst [vmem:[#allocation2 + $0x60] sm:$0xff] %v417
          %434 = vst [vmem:[#allocation2 + $0x68] sm:$0xff] %v418
          %435 = vst [vmem:[#allocation2 + $0x70] sm:$0xff] %v419
          %436 = vst [vmem:[#allocation2 + $0x78] sm:$0xff] %v420
          %v437 = vld [vmem:[#allocation2] sm:$0xff]
          %v438 = vld [vmem:[#allocation2 + $0x8] sm:$0xff]
          %v439 = vld [vmem:[#allocation2 + $0x10] sm:$0xff]
          %v440 = vld [vmem:[#allocation2 + $0x18] sm:$0xff]
          %v441 = vld [vmem:[#allocation2 + $0x20] sm:$0xff]
          %v442 = vld [vmem:[#allocation2 + $0x28] sm:$0xff]
          %v443 = vld [vmem:[#allocation2 + $0x30] sm:$0xff]
          %v444 = vld [vmem:[#allocation2 + $0x38] sm:$0xff]
          %v445 = vld [vmem:[#allocation2 + $0x40] sm:$0xff]
          %v446 = vld [vmem:[#allocation2 + $0x48] sm:$0xff]
          %v447 = vld [vmem:[#allocation2 + $0x50] sm:$0xff]
          %v448 = vld [vmem:[#allocation2 + $0x58] sm:$0xff]
          %v449 = vld [vmem:[#allocation2 + $0x60] sm:$0xff]
          %v450 = vld [vmem:[#allocation2 + $0x68] sm:$0xff]
          %v451 = vld [vmem:[#allocation2 + $0x70] sm:$0xff]
          %v452 = vld [vmem:[#allocation2 + $0x78] sm:$0xff]
          %453 = vadd.xlane.f32.xlu0 %v437
          %v454 = vpop.xlane.xlu0 %453
          %455 = vadd.xlane.f32.xlu0 %v438
          %v456 = vpop.xlane.xlu0 %455
          %457 = vadd.xlane.f32.xlu0 %v439
          %v458 = vpop.xlane.xlu0 %457
          %459 = vadd.xlane.f32.xlu0 %v440
          %v460 = vpop.xlane.xlu0 %459
          %461 = vadd.xlane.f32.xlu0 %v441
          %v462 = vpop.xlane.xlu0 %461
          %463 = vadd.xlane.f32.xlu0 %v442
          %v464 = vpop.xlane.xlu0 %463
          %465 = vadd.xlane.f32.xlu0 %v443
          %v466 = vpop.xlane.xlu0 %465
          %467 = vadd.xlane.f32.xlu0 %v444
          %v468 = vpop.xlane.xlu0 %467
          %469 = vadd.xlane.f32.xlu0 %v445
          %v470 = vpop.xlane.xlu0 %469
          %471 = vadd.xlane.f32.xlu0 %v446
          %v472 = vpop.xlane.xlu0 %471
          %473 = vadd.xlane.f32.xlu0 %v447
          %v474 = vpop.xlane.xlu0 %473
          %475 = vadd.xlane.f32.xlu0 %v448
          %v476 = vpop.xlane.xlu0 %475
          %477 = vadd.xlane.f32.xlu0 %v449
          %v478 = vpop.xlane.xlu0 %477
          %479 = vadd.xlane.f32.xlu0 %v450
          %v480 = vpop.xlane.xlu0 %479
          %481 = vadd.xlane.f32.xlu0 %v451
          %v482 = vpop.xlane.xlu0 %481
          %483 = vadd.xlane.f32.xlu0 %v452
          %v484 = vpop.xlane.xlu0 %483
          %v485 = vmul.f32 %v454, 0.0033333334
          %v486 = vmul.f32 %v456, 0.0033333334
          %v487 = vmul.f32 %v458, 0.0033333334
          %v488 = vmul.f32 %v460, 0.0033333334
          %v489 = vmul.f32 %v462, 0.0033333334
          %v490 = vmul.f32 %v464, 0.0033333334
          %v491 = vmul.f32 %v466, 0.0033333334
          %v492 = vmul.f32 %v468, 0.0033333334
          %v493 = vmul.f32 %v470, 0.0033333334
          %v494 = vmul.f32 %v472, 0.0033333334
          %v495 = vmul.f32 %v474, 0.0033333334
          %v496 = vmul.f32 %v476, 0.0033333334
          %v497 = vmul.f32 %v478, 0.0033333334
          %v498 = vmul.f32 %v480, 0.0033333334
          %v499 = vmul.f32 %v482, 0.0033333334
          %v500 = vmul.f32 %v484, 0.0033333334
          %v501 = vld [vmem:[%s1] sm:$0xff]
          %v502 = vld [vmem:[%s1 + $0x8] sm:$0xff]
          %v503 = vld [vmem:[%s1 + $0x10] sm:$0xff]
          %v504 = vld [vmem:[%s1 + $0x18] sm:$0xff]
          %v505 = vld [vmem:[%s1 + $0x20] sm:$0xff]
          %v506 = vld [vmem:[%s1 + $0x28] sm:$0xff]
          %v507 = vld [vmem:[%s1 + $0x30] sm:$0xff]
          %v508 = vld [vmem:[%s1 + $0x38] sm:$0xff]
          %v509 = vld [vmem:[%s2] sm:$0x1]
          %v511 = vperm.slane %v509, 0
          %v529 = vperm.slane %v485, %v371
          %v530 = vadd.s32 %v371, 4294967288
          %v531 = vperm.slane %v486, %v530
          %vm532 = vcmask 130112
          %v533 = vsel %vm532, %v531, %v529
          %v534 = vadd.s32 %v371, 4294967280
          %v535 = vperm.slane %v487, %v534
          %vm536 = vcmask 195712
          %v537 = vsel %vm536, %v535, %v533
          %v538 = vadd.s32 %v371, 4294967272
          %v539 = vperm.slane %v488, %v538
          %vm540 = vcmask 261312
          %v541 = vsel %vm540, %v539, %v537
          %v542 = vadd.s32 %v371, 4294967264
          %v543 = vperm.slane %v489, %v542
          %vm544 = vcmask 326912
          %v545 = vsel %vm544, %v543, %v541
          %v546 = vadd.s32 %v371, 4294967256
          %v547 = vperm.slane %v490, %v546
          %vm548 = vcmask 392512
          %v549 = vsel %vm548, %v547, %v545
          %v550 = vadd.s32 %v371, 4294967248
          %v551 = vperm.slane %v491, %v550
          %vm552 = vcmask 458112
          %v553 = vsel %vm552, %v551, %v549
          %v554 = vadd.s32 %v371, 4294967240
          %v555 = vperm.slane %v492, %v554
          %vm556 = vcmask 523712
          %v557 = vsel %vm556, %v555, %v553
          %v558 = vperm.slane %v493, %v371
          %v559 = vperm.slane %v494, %v530
          %v560 = vsel %vm532, %v559, %v558
          %v561 = vperm.slane %v495, %v534
          %v562 = vsel %vm536, %v561, %v560
          %v563 = vperm.slane %v496, %v538
          %v564 = vsel %vm540, %v563, %v562
          %v565 = vperm.slane %v497, %v542
          %v566 = vsel %vm544, %v565, %v564
          %v567 = vperm.slane %v498, %v546
          %v568 = vsel %vm548, %v567, %v566
          %v569 = vperm.slane %v499, %v550
          %v570 = vsel %vm552, %v569, %v568
          %v571 = vperm.slane %v500, %v554
          %v572 = vsel %vm556, %v571, %v570
          %vm573 = vcmask 1041409
          %v574 = vsel %vm573, %v572, %v557
          %vm575 = vcmask 523264
          %v576 = vsel %vm575, %v574, 0
          %578 = vmatpush.msra.mxu0 0.0
          %579 = vmatpush.msra.mxu0 0.0
          %580 = vmatpush.msra.mxu0 0.0
          %581 = vmatpush.msra.mxu0 0.0
          %582 = vmatpush.msra.mxu0 0.0
          %583 = vmatpush.msra.mxu0 0.0
          %584 = vmatpush.msra.mxu0 0.0
          %585 = vmatpush.msra.mxu0 0.0
          %586 = vmatpush.msra.mxu0 %v508
          %587 = vmatpush.msra.mxu0 %v507
          %588 = vmatpush.msra.mxu0 %v506
          %589 = vmatpush.msra.mxu0 %v505
          %590 = vmatpush.msra.mxu0 %v504
          %591 = vmatpush.msra.mxu0 %v503
          %592 = vmatpush.msra.mxu0 %v502
          %593 = vmatpush.msra.mxu0 %v501
          %594 = vmatmul.f32.gmra.mxu0 %v576
          %v595 = vpop.f32.mrf.mxu0
          %v596 = vadd.f32 %v511, %v595
          %597 = vdwg.mxu0
          %v598 = vmax.f32 %v596, 0.0
          %v599 = vld [vmem:[%s3] sm:$0xff]
          %v600 = vld [vmem:[%s3 + $0x8] sm:$0xff]
          %v601 = vld [vmem:[%s3 + $0x10] sm:$0xff]
          %v602 = vld [vmem:[%s3 + $0x18] sm:$0xff]
          %v603 = vld [vmem:[%s4] sm:$0x1]
          %v605 = vperm.slane %v603, 0
          %vm607 = vcmask 261120
          %v609 = vsel %vm607, %v598, 0
          %611 = vmatpush.msra.mxu0 0.0
          %612 = vmatpush.msra.mxu0 0.0
          %613 = vmatpush.msra.mxu0 0.0
          %614 = vmatpush.msra.mxu0 0.0
          %615 = vmatpush.msra.mxu0 0.0
          %616 = vmatpush.msra.mxu0 0.0
          %617 = vmatpush.msra.mxu0 0.0
          %618 = vmatpush.msra.mxu0 0.0
          %619 = vmatpush.msra.mxu0 0.0
          %620 = vmatpush.msra.mxu0 0.0
          %621 = vmatpush.msra.mxu0 0.0
          %622 = vmatpush.msra.mxu0 0.0
          %623 = vmatpush.msra.mxu0 %v602
          %624 = vmatpush.msra.mxu0 %v601
          %625 = vmatpush.msra.mxu0 %v600
          %626 = vmatpush.msra.mxu0 %v599
          %627 = vmatmul.f32.gmra.mxu0 %v609
          %v628 = vpop.f32.mrf.mxu0
          %v629 = vadd.f32 %v605, %v628
          %630 = vdwg.mxu0
          %v631 = vsub.f32 0.0, %v629
          %v632 = vmul.f32 %v631, 1.442695
          %v633 = vpow.pop %v632
          %v634 = vadd.f32 %v633, 1.0
          %v635 = vrcp.pop %v634
          %v636 = vmul.f32 %v634, %v635
          %v637 = vsub.f32 1.0, %v636
          %v638 = vmul.f32 %v635, %v637
          %v639 = vadd.f32 %v635, %v638
          %vm640 = vweird.f32 %v634
          %vm641 = vweird.f32 %v635
          %vm642 = vmor %vm640, %vm641
          %v643 = vsel %vm642, %v635, %v639
          %v644 = vand.u32 2147483647, %v634
          %vm645 = vcmp.eq.f32.partialorder %v644, 8.507059e+37
          %v646 = vand.u32 %v634, 2147483648
          %v647 = vor.u32 1.1754944e-38, %v646
          %v648 = vsel %vm645, %v647, %v643
          %v649 = vmul.f32 1.0, %v648
          %vm650 = vcmask 517120
          %651 = vst.msk [vmem:[%s260] sm:$0x3] %vm650, %v649
        $region56: #{se_weight.1} parent=39 // pred_fallthru
          _
        %s652 = sand.u32 %s154, 1
        %s653 = scalar_lea.sflag [#allocation5], %s652
        %s654 = sand.u32 %s154, 1
        %s655 = smul.addr %s654, 2
        %s656 = scalar_lea.vmem [#allocation6], %s655
        // Predicated region
        $region57: #{se_weight.1} parent=39 // pred_check
          %p657 = pneg %p164
        $region58: #{se_weight.1} parent=39 // pred_check_branch
          %659 = sbr.rel (%p657) target = $region60
        $region59: #{se_weight.1} parent=39 // pred_region
          %661 = vsyncadd %s653, 0
          %s662 = smul.addr %s26, 2
          %s663 = scalar_lea.hbm %s5, %s662
          %s665 = sshll.u32 %s656, 4
          %s666 = int_to_ptr.vmem [resolvable:$true] %s665
          %s667 = sshll.u32 %s663, 4
          %s668 = int_to_ptr.hbm [resolvable:$true] %s667
          %670 = dma.vmem_to_hbm [thread:$0]  %s666, 32, %s668, %s653
        $region60: #{se_weight.1} parent=39 // pred_fallthru
          _
      $region40: #{se_weight.1} parent=5 // pred_fallthru
        _
      %p671 = scmp.le.s32.totalorder 2, %s17
      // Predicated region
      $region61: #{se_weight.1} parent=5 // pred_check
        %p672 = pneg %p671
      $region62: #{se_weight.1} parent=5 // pred_check_branch
        %674 = sbr.rel (%p672) target = $region64
      $region63: #{se_weight.1} parent=5 // pred_region
        %s675 = ssub.s32 %s17, 2
        // Predicated region
        $region65: #{se_weight.1} parent=63 // pred_check
          %p676 = pneg %p170
        $region66: #{se_weight.1} parent=63 // pred_check_branch
          %678 = sbr.rel (%p676) target = $region68
        $region67: #{se_weight.1} parent=63 // pred_region
          %s679 = sand.u32 %s155, 1
          %s680 = scalar_lea.sflag [#allocation5], %s679
          %s681 = sand.u32 %s155, 1
          %s682 = smul.addr %s681, 2
          %s683 = scalar_lea.vmem [#allocation6], %s682
          %685 = dma.done %s680, 32
        $region68: #{se_weight.1} parent=63 // pred_fallthru
          _
      $region64: #{se_weight.1} parent=5 // pred_fallthru
        _
    $region6: #{se_weight.1} parent=1 // loop_footer
      %s21 = sadd.s32 1, %s17
    $region7: #{se_weight.1} parent=1 // loop_footer_branch
      %16 = sbr.rel target = $region3
    $region8: #{se_weight.1} parent=1 // loop_exit
      _
    %686 = vsyncpa [#allocation4], 1
    %s687 = scalar_lea.sflag [#allocation4], 1
    %688 = vsyncpa %s687, 1
    %689 = vsyncpa [#allocation5], 1
    %s690 = scalar_lea.sflag [#allocation5], 1
    %691 = vsyncpa %s690, 1

</llo_original>
